<compile_context>
chip_gen: v7x
topology: tpu7x:2x2x1
jax: 0.10.0
libtpu: 0.0.40
codegen_flags: <defaults>
</compile_context>

<pallas_src>
import math

import jax
import jax.numpy as jnp
from jax import lax
from jax.experimental import pallas as pl
from jax.experimental.pallas import tpu as pltpu


def _make_kernel(tm, D, M, has_tail, unroll):
    """Build the per-block kernel (tm, D, M, has_tail are Python constants)."""
    n_chunks = tm // 8

    def kernel(a_ref, b_ref, o_ref):
        if has_tail:
            # Valid rows in this block (static shapes -> only the last block is
            # ever partial; for full blocks the compare is trivially all-true).
            limit = M - pl.program_id(0) * tm
            row_iota = lax.broadcasted_iota(jnp.int32, (8, 1), 0)

        def body(i, acc):
            r = pl.multiple_of(i * 8, 8)
            a = a_ref[pl.ds(r, 8), :].astype(jnp.float32)
            b = b_ref[pl.ds(r, 8), :].astype(jnp.float32)
            prod = a * b
            if has_tail:
                valid = (i * 8 + row_iota) < limit
                prod = jnp.where(valid, prod, 0.0)
            return acc + prod

        acc = lax.fori_loop(0, n_chunks, body,
                            jnp.zeros((8, D), jnp.float32), unroll=unroll)
        o_ref[0] = acc

    return kernel


def _default_block_bytes():
    """Per-generation input-block size (2 inputs x 2 buffers must fit scoped VMEM)."""
    try:
        kind = jax.devices()[0].device_kind.lower()
    except Exception:  # pragma: no cover - defensive
        kind = ""
    if "v6" in kind or "v7" in kind:
        return 4 << 20   # 16 MiB live, under the 32 MiB scoped-VMEM default
    return 2 << 20       # v5e / unknown: 8 MiB live, under the 16 MiB default


def dot_product_similarity(tensor_1, tensor_2, scale_output=False,
                           block_bytes=None):
    """Pallas implementation of DotProductSimilarity.forward.

    tensor_1, tensor_2: same shape (..., D). Returns a float32 scalar.
    block_bytes: approximate HBM bytes per input block (auto-tuned per chip
      generation when None).
    """
    assert tensor_1.shape == tensor_2.shape
    assert tensor_1.ndim >= 1
    D = tensor_1.shape[-1]
    M = 1
    for s in tensor_1.shape[:-1]:
        M *= s
    assert M > 0 and D > 0, "empty input"

    # Free reshape: (..., D) -> (M, D); no element copies for the bulk path.
    a = tensor_1.reshape(M, D)
    b = tensor_2.reshape(M, D)
    itemsize = jnp.dtype(tensor_1.dtype).itemsize
    if block_bytes is None:
        block_bytes = _default_block_bytes()

    if M < 32:
        # Tiny input: pad at most 7 rows of zeros (zeros contribute 0 to sum).
        m_pad = ((M + 7) // 8) * 8
        if m_pad != M:
            a = jnp.concatenate([a, jnp.zeros((m_pad - M, D), a.dtype)])
            b = jnp.concatenate([b, jnp.zeros((m_pad - M, D), b.dtype)])
        tm = m_pad
        m_rows = m_pad
        has_tail = False
    else:
        # Row-block size: multiple of 32 (covers f32/bf16/i8 native tiles) and
        # no larger than the input, so the last block's start is always valid.
        rows_per_block = max(32, (block_bytes // (D * itemsize)) // 32 * 32)
        tm = min(rows_per_block, (M // 32) * 32)
        m_rows = M
        has_tail = (M % tm) != 0

    nb = -(-m_rows // tm)
    n_chunks = tm // 8
    unroll = min(8, n_chunks)

    kernel = _make_kernel(tm, D, M, has_tail, unroll)

    partials = pl.pallas_call(
        kernel,
        out_shape=jax.ShapeDtypeStruct((nb, 8, D), jnp.float32),
        grid_spec=pltpu.PrefetchScalarGridSpec(
            num_scalar_prefetch=0,
            grid=(nb,),
            in_specs=[
                pl.BlockSpec((tm, D), lambda i: (i, 0)),
                pl.BlockSpec((tm, D), lambda i: (i, 0)),
            ],
            out_specs=pl.BlockSpec((1, 8, D), lambda i: (i, 0, 0)),
        ),
        compiler_params=pltpu.CompilerParams(
            dimension_semantics=("parallel",),
        ),
    )(a, b)

    scale = 1.0 / M
    if scale_output:
        scale /= math.sqrt(D)
    # Single tiny cross-block reduction (nb x 8 x D f32) + mean/scale.
    return jnp.sum(partials) * jnp.float32(scale)


def _reference(tensor_1, tensor_2, scale_output=False):
    result = jnp.sum(
        tensor_1.astype(jnp.float32) * tensor_2.astype(jnp.float32), axis=-1)
    if scale_output:
        result = result / math.sqrt(tensor_1.shape[-1])
    return jnp.mean(result)


if __name__ == "__main__":
    key = jax.random.PRNGKey(0)

    # Small shape consistent with the module: batch=2, seq=8, hidden=32.
    k1, k2 = jax.random.split(key)
    B, S, D = 2, 8, 32
    t1 = jax.random.normal(k1, (B, S, D), dtype=jnp.float32)
    t2 = jax.random.normal(k2, (B, S, D), dtype=jnp.float32)
    for scale_output in (False, True):
        out = jax.block_until_ready(
            dot_product_similarity(t1, t2, scale_output=scale_output))
        ref = _reference(t1, t2, scale_output=scale_output)
        assert jnp.allclose(out, ref, rtol=1e-5, atol=1e-5), (out, ref)

    # Larger, aligned shape (single big block, default per-chip block size).
    k3, k4 = jax.random.split(k2)
    u1 = jax.random.normal(k3, (4, 128, 256), dtype=jnp.float32)
    u2 = jax.random.normal(k4, (4, 128, 256), dtype=jnp.float32)
    out = jax.block_until_ready(
        dot_product_similarity(u1, u2, scale_output=True))
    ref = _reference(u1, u2, scale_output=True)
    assert jnp.allclose(out, ref, rtol=1e-4, atol=1e-4), (out, ref)

    # Ragged shape: exercises multi-block grid + in-kernel tail masking
    # (M=300 rows, tm=64 -> 5 blocks, last block only 44/64 rows valid).
    k5, k6 = jax.random.split(k4)
    v1 = jax.random.normal(k5, (3, 100, 160), dtype=jnp.float32)
    v2 = jax.random.normal(k6, (3, 100, 160), dtype=jnp.float32)
    out = jax.block_until_ready(
        dot_product_similarity(v1, v2, scale_output=True,
                               block_bytes=64 * 160 * 4))
    ref = _reference(v1, v2, scale_output=True)
    assert jnp.allclose(out, ref, rtol=1e-4, atol=1e-4), (out, ref)

    # bf16 inputs (native dtype through the DMA) with a ragged multi-block grid.
    k7, k8 = jax.random.split(k6)
    w1 = jax.random.normal(k7, (5, 50, 192), dtype=jnp.bfloat16)
    w2 = jax.random.normal(k8, (5, 50, 192), dtype=jnp.bfloat16)
    out = jax.block_until_ready(
        dot_product_similarity(w1, w2, scale_output=False,
                               block_bytes=96 * 192 * 2))
    ref = _reference(w1, w2, scale_output=False)
    assert jnp.allclose(out, ref, rtol=1e-4, atol=1e-4), (out, ref)

    print("KERNEL_OK")
</pallas_src>

<mosaic_0001>
module attributes {stable_mosaic.version = 11 : i64} {
  func.func @kernel(%arg0: i32, %arg1: memref<16x32xf32, #tpu.memory_space<vmem>>, %arg2: memref<16x32xf32, #tpu.memory_space<vmem>>, %arg3: memref<1x8x32xf32, #tpu.memory_space<vmem>>) attributes {dimension_semantics = [#tpu.dimension_semantics<parallel>], iteration_bounds = array<i64: 1>, scalar_prefetch = 0 : i64, scratch_operands = 0 : i64, tpu.core_type = #tpu.core_type<tc>, window_params = [{transform_indices = @transform_0, window_bounds = array<i64: 16, 32>}, {transform_indices = @transform_1, window_bounds = array<i64: 16, 32>}, {transform_indices = @transform_2, window_bounds = array<i64: 1, 8, 32>}]} {
    %cst = arith.constant 0.000000e+00 : f32
    %0 = vector.broadcast %cst : f32 to vector<8x32xf32>
    %c0_i32 = arith.constant 0 : i32
    %c8_i32 = arith.constant 8 : i32
    %1 = arith.muli %c0_i32, %c8_i32 : i32
    %2 = tpu.assume_multiple %1, 8 : i32
    %3 = arith.index_cast %2 : i32 to index
    %c0 = arith.constant 0 : index
    %4 = vector.load %arg1[%3, %c0] : memref<16x32xf32, #tpu.memory_space<vmem>>, vector<8x32xf32>
    %5 = arith.index_cast %2 : i32 to index
    %c0_0 = arith.constant 0 : index
    %6 = vector.load %arg2[%5, %c0_0] : memref<16x32xf32, #tpu.memory_space<vmem>>, vector<8x32xf32>
    %7 = arith.mulf %4, %6 : vector<8x32xf32>
    %8 = arith.addf %0, %7 : vector<8x32xf32>
    %c1_i32 = arith.constant 1 : i32
    %c8_i32_1 = arith.constant 8 : i32
    %9 = arith.muli %c1_i32, %c8_i32_1 : i32
    %10 = tpu.assume_multiple %9, 8 : i32
    %11 = arith.index_cast %10 : i32 to index
    %c0_2 = arith.constant 0 : index
    %12 = vector.load %arg1[%11, %c0_2] : memref<16x32xf32, #tpu.memory_space<vmem>>, vector<8x32xf32>
    %13 = arith.index_cast %10 : i32 to index
    %c0_3 = arith.constant 0 : index
    %14 = vector.load %arg2[%13, %c0_3] : memref<16x32xf32, #tpu.memory_space<vmem>>, vector<8x32xf32>
    %15 = arith.mulf %12, %14 : vector<8x32xf32>
    %16 = arith.addf %8, %15 : vector<8x32xf32>
    %c2_i32 = arith.constant 2 : i32
    %c0_4 = arith.constant 0 : index
    %c0_5 = arith.constant 0 : index
    %c0_6 = arith.constant 0 : index
    %17 = vector.load %arg3[%c0_4, %c0_5, %c0_6] : memref<1x8x32xf32, #tpu.memory_space<vmem>>, vector<1x8x32xf32>
    %18 = vector.shape_cast %17 : vector<1x8x32xf32> to vector<8x32xf32>
    %19 = vector.shape_cast %16 : vector<8x32xf32> to vector<1x8x32xf32>
    tpu.vector_store %arg3[%c0_4, %c0_5, %c0_6], %19 {strides = array<i32>} : memref<1x8x32xf32, #tpu.memory_space<vmem>>, vector<1x8x32xf32>,
    return
  }
  func.func @transform_0(%arg0: i32) -> (i32, i32) {
    %c0_i32 = arith.constant 0 : i32
    %c0_i32_0 = arith.constant 0 : i32
    return %arg0, %c0_i32 : i32, i32
  }
  func.func @transform_1(%arg0: i32) -> (i32, i32) {
    %c0_i32 = arith.constant 0 : i32
    %c0_i32_0 = arith.constant 0 : i32
    return %arg0, %c0_i32 : i32, i32
  }
  func.func @transform_2(%arg0: i32) -> (i32, i32, i32) {
    %c0_i32 = arith.constant 0 : i32
    %c0_i32_0 = arith.constant 0 : i32
    %c0_i32_1 = arith.constant 0 : i32
    return %arg0, %c0_i32, %c0_i32_0 : i32, i32, i32
  }
}

</mosaic_0001>

<llo_original>
// kernel: tpu_custom_call.1
$region0: #{tpu_custom_call.1}
  #allocation0 [shape = 'u32[]', space=smem, size = 0x4, offset = 0x4, fixed_abs, tag = 'smem constant byte address 0x4 - core index']
  #allocation1 [shape = 'u32[144,128]{1,0:T(1,128)}', space=vmem, size = 0x12000, scoped, tag = 'internal scratch']
  %s0 = inlined_call_operand.hbm [shape: f32[16,32], index: 0, kind: input, shape index: {}]
  %s1 = inlined_call_operand.hbm [shape: f32[16,32], index: 1, kind: input, shape index: {}]
  %s2 = inlined_call_operand.hbm [shape: f32[1,8,32], index: 2, kind: output, shape index: {}]
  %s3 = sld [smem:[#allocation0]]
  $region26: #{tpu_custom_call.1} parent=0
    _
  %s5 = ssub.s32 1, %s3
  %s6 = scalar_select 0, %s5, %s3
  $region1: #{tpu_custom_call.1} parent=0
    #allocation2 [shape = 'u8[8192]{0}', space=vmem, size = 0x2000, scoped, tag = 'input window, operand 0, single buffered']
    #allocation3 [shape = 's32[1]{0}', space=sflag, size = 0x4, scoped, tag = 'scoped memory for tpu_custom_call.1']
    #allocation4 [shape = 's32[1]{0}', space=sflag, size = 0x4, scoped, tag = 'scoped memory for tpu_custom_call.1']
    #allocation5 [shape = 'u8[8192]{0}', space=vmem, size = 0x2000, scoped, tag = 'input window, operand 1, single buffered']
    #allocation6 [shape = 's32[1]{0}', space=sflag, size = 0x4, scoped, tag = 'scoped memory for tpu_custom_call.1']
    #allocation7 [shape = 'u8[4096]{0}', space=vmem, size = 0x1000, scoped, tag = 'output window, operand 0, single buffered']
    %7 = vsyncpa [#allocation3], 0
    %8 = vsyncpa [#allocation6], 0
    %9 = vsyncpa [#allocation4], 0
    // Predicated region
    $region2: #{tpu_custom_call.1} parent=1 // pred_check
      _
    $region3: #{tpu_custom_call.1} parent=1 // pred_check_branch
      %11 = sbr.rel (0) target = $region5
    $region4: #{tpu_custom_call.1} parent=1 // pred_region
      %s13 = ssub.s32 256, 256
      %14 = vsyncadd [#allocation3], %s13
      %s15 = sshll.u32 [#allocation2], 4
      %s16 = int_to_ptr.vmem [resolvable:$true] %s15
      %21 = dma.hbm_to_vmem [thread:$0]  %s0, 256, %s16, [#allocation3], 128, 128, 8
    $region5: #{tpu_custom_call.1} parent=1 // pred_fallthru
      _
    // Predicated region
    $region6: #{tpu_custom_call.1} parent=1 // pred_check
      _
    $region7: #{tpu_custom_call.1} parent=1 // pred_check_branch
      %23 = sbr.rel (0) target = $region9
    $region8: #{tpu_custom_call.1} parent=1 // pred_region
      %s25 = ssub.s32 256, 256
      %26 = vsyncadd [#allocation6], %s25
      %s27 = sshll.u32 [#allocation5], 4
      %s28 = int_to_ptr.vmem [resolvable:$true] %s27
      %33 = dma.hbm_to_vmem [thread:$0]  %s1, 256, %s28, [#allocation6], 128, 128, 8
    $region9: #{tpu_custom_call.1} parent=1 // pred_fallthru
      _
    // Predicated region
    $region10: #{tpu_custom_call.1} parent=1 // pred_check
      _
    $region11: #{tpu_custom_call.1} parent=1 // pred_check_branch
      %35 = sbr.rel (0) target = $region13
    $region12: #{tpu_custom_call.1} parent=1 // pred_region
      %36 = dma.done [#allocation3], 256
    $region13: #{tpu_custom_call.1} parent=1 // pred_fallthru
      _
    // Predicated region
    $region14: #{tpu_custom_call.1} parent=1 // pred_check
      _
    $region15: #{tpu_custom_call.1} parent=1 // pred_check_branch
      %38 = sbr.rel (0) target = $region17
    $region16: #{tpu_custom_call.1} parent=1 // pred_region
      %39 = dma.done [#allocation6], 256
    $region17: #{tpu_custom_call.1} parent=1 // pred_fallthru
      _
    %v40 = vld [vmem:[#allocation2] sm:$0xff]
    %v41 = vld [vmem:[#allocation5] sm:$0xff]
    %v42 = vmul.f32 %v40, %v41
    %v43 = vadd.f32 %v42, 0.0
    %s44 = scalar_lea.vmem [#allocation2], 8
    %v45 = vld [vmem:[%s44] sm:$0xff]
    %s46 = scalar_lea.vmem [#allocation5], 8
    %v47 = vld [vmem:[%s46] sm:$0xff]
    %v48 = vmul.f32 %v45, %v47
    %v49 = vadd.f32 %v43, %v48
    %vm50 = vcmask 261120
    %51 = vst.msk [vmem:[#allocation7] sm:$0xff] %vm50, %v49
    // Predicated region
    $region18: #{tpu_custom_call.1} parent=1 // pred_check
      _
    $region19: #{tpu_custom_call.1} parent=1 // pred_check_branch
      %53 = sbr.rel (0) target = $region21
    $region20: #{tpu_custom_call.1} parent=1 // pred_region
      %s55 = ssub.s32 128, 128
      %56 = vsyncadd [#allocation4], %s55
      %s58 = sshll.u32 [#allocation7], 4
      %s59 = int_to_ptr.vmem [resolvable:$true] %s58
      %61 = dma.vmem_to_hbm [thread:$0]  %s59, 128, %s2, [#allocation4]
    $region21: #{tpu_custom_call.1} parent=1 // pred_fallthru
      _
    // Predicated region
    $region22: #{tpu_custom_call.1} parent=1 // pred_check
      _
    $region23: #{tpu_custom_call.1} parent=1 // pred_check_branch
      %63 = sbr.rel (0) target = $region25
    $region24: #{tpu_custom_call.1} parent=1 // pred_region
      %64 = dma.done [#allocation4], 128
    $region25: #{tpu_custom_call.1} parent=1 // pred_fallthru
      _
    %65 = vsyncpa [#allocation3], 1
    %66 = vsyncpa [#allocation6], 1
    %67 = vsyncpa [#allocation4], 1

</llo_original>
